<compile_context>
chip_gen: v6e
topology: v6e:2x2x1
jax: 0.10.0
libtpu: 0.0.40
codegen_flags: <defaults>
</compile_context>

<pallas_src>
import jax
import jax.numpy as jnp
from jax.experimental import pallas as pl
from jax.experimental.pallas import tpu as pltpu


def _round_up(x, m):
    return ((x + m - 1) // m) * m


def actor_kernel(x_ref, w1_ref, w2_ref, w3_ref, w4_ref, b_ref, o_ref):
    """Fused forward for one (TM, F_pad) batch tile.

    Eval-mode BatchNorms are pre-folded into the following Linear weights and
    Dropout is identity, so per tile we do 4 MXU matmuls + cheap activations.
    """
    cdt = w1_ref.dtype                       # dtype fed to the MXU (f32 or bf16)
    b = b_ref[...]                           # (8, 128) f32 packed biases, rows 0..3 used

    x = x_ref[...].astype(cdt)

    # Linear(n_states, 128) + LeakyReLU(0.2)
    h = jnp.dot(x, w1_ref[...], preferred_element_type=jnp.float32) + b[0:1, :]
    h = jnp.maximum(h, 0.2 * h)              # leaky-relu as a single VALU max

    # [BN1 folded] Linear(128, 128) + Tanh  (Dropout: identity in eval)
    h = jnp.dot(h.astype(cdt), w2_ref[...], preferred_element_type=jnp.float32) + b[1:2, :]
    h = jnp.tanh(h)

    # [BN2 folded] Linear(128, 64 -> padded 128) + Tanh  (Dropout: identity)
    h = jnp.dot(h.astype(cdt), w3_ref[...], preferred_element_type=jnp.float32) + b[2:3, :]
    h = jnp.tanh(h)

    # [BN3 folded] Linear(64, n_actions -> padded 128) + Sigmoid
    h = jnp.dot(h.astype(cdt), w4_ref[...], preferred_element_type=jnp.float32) + b[3:4, :]
    o_ref[...] = (0.5 * (jnp.tanh(0.5 * h) + 1.0)).astype(o_ref.dtype)   # sigmoid via one tanh


def init_actor_params(key, n_states, n_actions, randomize_bn=False):
    """Parameters matching the PyTorch Actor._init_weights():
    Linear weights ~ N(0, 0.01), biases ~ U(-0.1, 0.1).
    BN buffers at PyTorch defaults, or randomized to emulate a trained net."""
    dims = [(n_states, 128), (128, 128), (128, 64), (64, n_actions)]
    bn_dims = [128, 128, 64]
    keys = jax.random.split(key, 2 * len(dims) + 4 * len(bn_dims))
    params = {}
    for i, (din, dout) in enumerate(dims):
        kw, kb = keys[2 * i], keys[2 * i + 1]
        # stored (in, out) so forward is x @ W  (== PyTorch x @ W.T with W (out, in))
        params[f"w{i+1}"] = 0.01 * jax.random.normal(kw, (din, dout), jnp.float32)
        params[f"b{i+1}"] = jax.random.uniform(kb, (1, dout), jnp.float32, -0.1, 0.1)
    off = 2 * len(dims)
    for i, d in enumerate(bn_dims):
        kg, kbe, km, kv = keys[off + 4 * i: off + 4 * i + 4]
        if randomize_bn:
            params[f"g{i+1}"] = jax.random.uniform(kg, (1, d), jnp.float32, 0.8, 1.2)
            params[f"be{i+1}"] = 0.1 * jax.random.normal(kbe, (1, d), jnp.float32)
            params[f"m{i+1}"] = 0.1 * jax.random.normal(km, (1, d), jnp.float32)
            params[f"v{i+1}"] = jax.random.uniform(kv, (1, d), jnp.float32, 0.5, 1.5)
        else:
            params[f"g{i+1}"] = jnp.ones((1, d), jnp.float32)
            params[f"be{i+1}"] = jnp.zeros((1, d), jnp.float32)
            params[f"m{i+1}"] = jnp.zeros((1, d), jnp.float32)
            params[f"v{i+1}"] = jnp.ones((1, d), jnp.float32)
    return params


def prepare_actor_params(params, n_states, n_actions, param_dtype=jnp.float32):
    """One-time transform: fold eval-mode BN into the *following* Linear
    (a nonlinearity sits between each Linear and its BN, so the fold must go
    forward:  (s*h + t) @ W + b = h @ (s[:,None]*W) + (t @ W + b)),
    zero-pad everything to lane-dense 128 multiples, pack the biases."""
    assert n_actions <= 128, "bias packing assumes n_actions <= 128"
    eps = jnp.float32(1e-5)

    def bn_affine(i):
        s = params[f"g{i}"] * jax.lax.rsqrt(params[f"v{i}"] + eps)   # (1, d)
        t = params[f"be{i}"] - params[f"m{i}"] * s                   # (1, d)
        return s, t

    s1, t1 = bn_affine(1)
    s2, t2 = bn_affine(2)
    s3, t3 = bn_affine(3)

    w1, b1 = params["w1"], params["b1"]
    w2 = s1.reshape(-1, 1) * params["w2"]
    b2 = t1 @ params["w2"] + params["b2"]
    w3 = s2.reshape(-1, 1) * params["w3"]
    b3 = t2 @ params["w3"] + params["b3"]
    w4 = s3.reshape(-1, 1) * params["w4"]
    b4 = t3 @ params["w4"] + params["b4"]

    F_pad = _round_up(max(n_states, 1), 128)
    N_pad = _round_up(max(n_actions, 1), 128)
    H3, H3_pad = 64, 128

    w1p = jnp.pad(w1, ((0, F_pad - n_states), (0, 0)))
    w2p = w2
    w3p = jnp.pad(w3, ((0, 0), (0, H3_pad - H3)))
    w4p = jnp.pad(w4, ((0, H3_pad - H3), (0, N_pad - n_actions)))

    bias = jnp.zeros((8, 128), jnp.float32)      # packed: one DMA instead of many tiny ones
    bias = bias.at[0, :128].set(b1[0])
    bias = bias.at[1, :128].set(b2[0])
    bias = bias.at[2, :H3].set(b3[0])
    bias = bias.at[3, :n_actions].set(b4[0])

    return {
        "w1": w1p.astype(param_dtype),
        "w2": w2p.astype(param_dtype),
        "w3": w3p.astype(param_dtype),
        "w4": w4p.astype(param_dtype),
        "bias": bias,
        "n_states": n_states,
        "n_actions": n_actions,
    }


def actor_forward(x, kparams, *, tile_m=512):
    B, n_states = x.shape
    assert n_states == kparams["n_states"]
    n_actions = kparams["n_actions"]
    F_pad = kparams["w1"].shape[0]
    N_pad = kparams["w4"].shape[1]

    # Batch tile: 512 amortizes per-grid-step overhead (~0.35us) while keeping
    # double-buffered (TM, 128) f32 tiles tiny vs v7x's 64 MiB VMEM.
    TM = min(tile_m, _round_up(B, 8))
    B_pad = _round_up(B, TM)

    xp = x
    if F_pad != n_states:
        xp = jnp.pad(xp, ((0, 0), (0, F_pad - n_states)))
    if B_pad != B:
        xp = jnp.pad(xp, ((0, B_pad - B), (0, 0)))

    grid = (B_pad // TM,)

    w_itemsize = jnp.dtype(kparams["w1"].dtype).itemsize
    weight_bytes = sum(int(kparams[k].size) * w_itemsize for k in ("w1", "w2", "w3", "w4"))
    cost = pl.CostEstimate(
        flops=2 * B_pad * (F_pad * 128 + 128 * 128 + 128 * 128 + 128 * N_pad),
        transcendentals=B_pad * (128 + 128 + N_pad),
        bytes_accessed=int(xp.size) * 4 + weight_bytes + 8 * 128 * 4 + B_pad * N_pad * 4,
    )

    out = pl.pallas_call(
        actor_kernel,
        out_shape=jax.ShapeDtypeStruct((B_pad, N_pad), jnp.float32),
        grid=grid,
        in_specs=[
            pl.BlockSpec((TM, F_pad), lambda i: (i, 0)),            # x: tiled over batch
            pl.BlockSpec(kparams["w1"].shape, lambda i: (0, 0)),    # weights: VMEM-resident
            pl.BlockSpec(kparams["w2"].shape, lambda i: (0, 0)),
            pl.BlockSpec(kparams["w3"].shape, lambda i: (0, 0)),
            pl.BlockSpec(kparams["w4"].shape, lambda i: (0, 0)),
            pl.BlockSpec(kparams["bias"].shape, lambda i: (0, 0)),  # packed biases
        ],
        out_specs=pl.BlockSpec((TM, N_pad), lambda i: (i, 0)),      # lane-dense output block
        compiler_params=pltpu.CompilerParams(
            dimension_semantics=("parallel",),                      # megacore-shard the batch axis
        ),
        cost_estimate=cost,
    )(xp, kparams["w1"], kparams["w2"], kparams["w3"], kparams["w4"], kparams["bias"])

    return out[:B, :n_actions]


def actor_reference(x, params):
    """Pure-JAX reference (unfolded, eval-mode BN) for the sanity check."""
    eps = 1e-5

    def bn(h, i):
        return (h - params[f"m{i}"]) / jnp.sqrt(params[f"v{i}"] + eps) * params[f"g{i}"] + params[f"be{i}"]

    h = x @ params["w1"] + params["b1"]
    h = jnp.where(h >= 0, h, 0.2 * h)
    h = bn(h, 1)
    h = jnp.tanh(h @ params["w2"] + params["b2"])
    h = bn(h, 2)
    h = jnp.tanh(h @ params["w3"] + params["b3"])
    h = bn(h, 3)
    return jax.nn.sigmoid(h @ params["w4"] + params["b4"])


if __name__ == "__main__":
    n_states, n_actions, batch = 32, 8, 16
    key = jax.random.PRNGKey(0)
    kx, kp = jax.random.split(key)
    x = jax.random.normal(kx, (batch, n_states), jnp.float32)
    # randomize_bn=True exercises the BN->Linear fold with non-trivial buffers
    params = init_actor_params(kp, n_states, n_actions, randomize_bn=True)

    ref = actor_reference(x, params)

    # f32 path (tight tolerance)
    kp32 = prepare_actor_params(params, n_states, n_actions, jnp.float32)
    out32 = jax.block_until_ready(actor_forward(x, kp32))
    assert out32.shape == (batch, n_actions)
    assert jnp.allclose(out32, ref, atol=1e-5, rtol=1e-5), "f32 mismatch vs reference"

    # bf16-weight path (v6e/v7x MXU friendly; f32 accumulate + f32 elementwise)
    kpbf = prepare_actor_params(params, n_states, n_actions, jnp.bfloat16)
    outbf = jax.block_until_ready(actor_forward(x, kpbf))
    assert outbf.shape == (batch, n_actions)
    assert jnp.allclose(outbf, ref, atol=5e-3, rtol=5e-2), "bf16 mismatch vs reference"

    print("KERNEL_OK")
</pallas_src>

<mosaic_0001>
module attributes {stable_mosaic.version = 11 : i64} {
  func.func @actor_kernel(%arg0: i32, %arg1: memref<16x128xf32, #tpu.memory_space<vmem>>, %arg2: memref<128x128xf32, #tpu.memory_space<vmem>>, %arg3: memref<128x128xf32, #tpu.memory_space<vmem>>, %arg4: memref<128x128xf32, #tpu.memory_space<vmem>>, %arg5: memref<128x128xf32, #tpu.memory_space<vmem>>, %arg6: memref<8x128xf32, #tpu.memory_space<vmem>>, %arg7: memref<16x128xf32, #tpu.memory_space<vmem>>) attributes {dimension_semantics = [#tpu.dimension_semantics<parallel>], iteration_bounds = array<i64: 1>, scalar_prefetch = 0 : i64, scratch_operands = 0 : i64, tpu.core_type = #tpu.core_type<tc>, window_params = [{transform_indices = @transform_0, window_bounds = array<i64: 16, 128>}, {pipeline_mode = #tpu.pipeline_mode<synchronous>, transform_indices = @transform_1, window_bounds = array<i64: 128, 128>}, {pipeline_mode = #tpu.pipeline_mode<synchronous>, transform_indices = @transform_2, window_bounds = array<i64: 128, 128>}, {pipeline_mode = #tpu.pipeline_mode<synchronous>, transform_indices = @transform_3, window_bounds = array<i64: 128, 128>}, {pipeline_mode = #tpu.pipeline_mode<synchronous>, transform_indices = @transform_4, window_bounds = array<i64: 128, 128>}, {pipeline_mode = #tpu.pipeline_mode<synchronous>, transform_indices = @transform_5, window_bounds = array<i64: 8, 128>}, {transform_indices = @transform_6, window_bounds = array<i64: 16, 128>}]} {
    %c0 = arith.constant 0 : index
    %c0_0 = arith.constant 0 : index
    %0 = vector.load %arg6[%c0, %c0_0] : memref<8x128xf32, #tpu.memory_space<vmem>>, vector<8x128xf32>
    %c0_1 = arith.constant 0 : index
    %c0_2 = arith.constant 0 : index
    %1 = vector.load %arg1[%c0_1, %c0_2] : memref<16x128xf32, #tpu.memory_space<vmem>>, vector<16x128xf32>
    %c0_3 = arith.constant 0 : index
    %c0_4 = arith.constant 0 : index
    %2 = vector.load %arg2[%c0_3, %c0_4] : memref<128x128xf32, #tpu.memory_space<vmem>>, vector<128x128xf32>
    %cst = arith.constant dense<0.000000e+00> : vector<16x128xf32>
    %3 = tpu.matmul %1, %2, %cst {dimension_numbers = #tpu.dot_dimension_numbers<[1], [0], [0], [1], [0, 0, 1, 1], [], []>} : vector<16x128xf32>, vector<128x128xf32>, vector<16x128xf32> -> vector<16x128xf32>
    %4 = vector.extract_strided_slice %0 {offsets = [0, 0], sizes = [1, 128], strides = [1, 1]} : vector<8x128xf32> to vector<1x128xf32>
    %5 = vector.broadcast %4 : vector<1x128xf32> to vector<16x128xf32>
    %6 = arith.addf %3, %5 : vector<16x128xf32>
    %cst_5 = arith.constant 2.000000e-01 : f32
    %7 = vector.broadcast %cst_5 : f32 to vector<16x128xf32>
    %8 = arith.mulf %7, %6 : vector<16x128xf32>
    %9 = arith.maximumf %6, %8 : vector<16x128xf32>
    %c0_6 = arith.constant 0 : index
    %c0_7 = arith.constant 0 : index
    %10 = vector.load %arg3[%c0_6, %c0_7] : memref<128x128xf32, #tpu.memory_space<vmem>>, vector<128x128xf32>
    %cst_8 = arith.constant dense<0.000000e+00> : vector<16x128xf32>
    %11 = tpu.matmul %9, %10, %cst_8 {dimension_numbers = #tpu.dot_dimension_numbers<[1], [0], [0], [1], [0, 0, 1, 1], [], []>} : vector<16x128xf32>, vector<128x128xf32>, vector<16x128xf32> -> vector<16x128xf32>
    %12 = vector.extract_strided_slice %0 {offsets = [1, 0], sizes = [1, 128], strides = [1, 1]} : vector<8x128xf32> to vector<1x128xf32>
    %13 = vector.broadcast %12 : vector<1x128xf32> to vector<16x128xf32>
    %14 = arith.addf %11, %13 : vector<16x128xf32>
    %15 = math.tanh %14 : vector<16x128xf32>
    %c0_9 = arith.constant 0 : index
    %c0_10 = arith.constant 0 : index
    %16 = vector.load %arg4[%c0_9, %c0_10] : memref<128x128xf32, #tpu.memory_space<vmem>>, vector<128x128xf32>
    %cst_11 = arith.constant dense<0.000000e+00> : vector<16x128xf32>
    %17 = tpu.matmul %15, %16, %cst_11 {dimension_numbers = #tpu.dot_dimension_numbers<[1], [0], [0], [1], [0, 0, 1, 1], [], []>} : vector<16x128xf32>, vector<128x128xf32>, vector<16x128xf32> -> vector<16x128xf32>
    %18 = vector.extract_strided_slice %0 {offsets = [2, 0], sizes = [1, 128], strides = [1, 1]} : vector<8x128xf32> to vector<1x128xf32>
    %19 = vector.broadcast %18 : vector<1x128xf32> to vector<16x128xf32>
    %20 = arith.addf %17, %19 : vector<16x128xf32>
    %21 = math.tanh %20 : vector<16x128xf32>
    %c0_12 = arith.constant 0 : index
    %c0_13 = arith.constant 0 : index
    %22 = vector.load %arg5[%c0_12, %c0_13] : memref<128x128xf32, #tpu.memory_space<vmem>>, vector<128x128xf32>
    %cst_14 = arith.constant dense<0.000000e+00> : vector<16x128xf32>
    %23 = tpu.matmul %21, %22, %cst_14 {dimension_numbers = #tpu.dot_dimension_numbers<[1], [0], [0], [1], [0, 0, 1, 1], [], []>} : vector<16x128xf32>, vector<128x128xf32>, vector<16x128xf32> -> vector<16x128xf32>
    %24 = vector.extract_strided_slice %0 {offsets = [3, 0], sizes = [1, 128], strides = [1, 1]} : vector<8x128xf32> to vector<1x128xf32>
    %25 = vector.broadcast %24 : vector<1x128xf32> to vector<16x128xf32>
    %26 = arith.addf %23, %25 : vector<16x128xf32>
    %cst_15 = arith.constant 5.000000e-01 : f32
    %27 = vector.broadcast %cst_15 : f32 to vector<16x128xf32>
    %28 = arith.mulf %27, %26 : vector<16x128xf32>
    %29 = math.tanh %28 : vector<16x128xf32>
    %cst_16 = arith.constant 1.000000e+00 : f32
    %30 = vector.broadcast %cst_16 : f32 to vector<16x128xf32>
    %31 = arith.addf %29, %30 : vector<16x128xf32>
    %cst_17 = arith.constant 5.000000e-01 : f32
    %32 = vector.broadcast %cst_17 : f32 to vector<16x128xf32>
    %33 = arith.mulf %32, %31 : vector<16x128xf32>
    %c0_18 = arith.constant 0 : index
    %c0_19 = arith.constant 0 : index
    %34 = vector.load %arg7[%c0_18, %c0_19] : memref<16x128xf32, #tpu.memory_space<vmem>>, vector<16x128xf32>
    tpu.vector_store %arg7[%c0_18, %c0_19], %33 {strides = array<i32>} : memref<16x128xf32, #tpu.memory_space<vmem>>, vector<16x128xf32>,
    return
  }
  func.func @transform_0(%arg0: i32) -> (i32, i32) {
    %c0_i32 = arith.constant 0 : i32
    %c0_i32_0 = arith.constant 0 : i32
    return %arg0, %c0_i32 : i32, i32
  }
  func.func @transform_1(%arg0: i32) -> (i32, i32) {
    %c0_i32 = arith.constant 0 : i32
    %c0_i32_0 = arith.constant 0 : i32
    %c0_i32_1 = arith.constant 0 : i32
    return %c0_i32, %c0_i32_0 : i32, i32
  }
  func.func @transform_2(%arg0: i32) -> (i32, i32) {
    %c0_i32 = arith.constant 0 : i32
    %c0_i32_0 = arith.constant 0 : i32
    %c0_i32_1 = arith.constant 0 : i32
    return %c0_i32, %c0_i32_0 : i32, i32
  }
  func.func @transform_3(%arg0: i32) -> (i32, i32) {
    %c0_i32 = arith.constant 0 : i32
    %c0_i32_0 = arith.constant 0 : i32
    %c0_i32_1 = arith.constant 0 : i32
    return %c0_i32, %c0_i32_0 : i32, i32
  }
  func.func @transform_4(%arg0: i32) -> (i32, i32) {
    %c0_i32 = arith.constant 0 : i32
    %c0_i32_0 = arith.constant 0 : i32
    %c0_i32_1 = arith.constant 0 : i32
    return %c0_i32, %c0_i32_0 : i32, i32
  }
  func.func @transform_5(%arg0: i32) -> (i32, i32) {
    %c0_i32 = arith.constant 0 : i32
    %c0_i32_0 = arith.constant 0 : i32
    %c0_i32_1 = arith.constant 0 : i32
    return %c0_i32, %c0_i32_0 : i32, i32
  }
  func.func @transform_6(%arg0: i32) -> (i32, i32) {
    %c0_i32 = arith.constant 0 : i32
    %c0_i32_0 = arith.constant 0 : i32
    return %arg0, %c0_i32 : i32, i32
  }
}

</mosaic_0001>

<llo_original>
// kernel: tpu_custom_call.1
$region0: #{tpu_custom_call.1}
  #allocation0 [shape = 'u32[]', space=smem, size = 0x4, offset = 0x4, fixed_abs, tag = 'smem constant byte address 0x4 - core index']
  #allocation1 [shape = 'u32[144,128]{1,0:T(1,128)}', space=vmem, size = 0x12000, scoped, tag = 'internal scratch']
  %s0 = inlined_call_operand.hbm [shape: f32[16,128], index: 0, kind: input, shape index: {}]
  %s1 = inlined_call_operand.hbm [shape: f32[128,128], index: 1, kind: input, shape index: {}]
  %s2 = inlined_call_operand.hbm [shape: f32[128,128], index: 2, kind: input, shape index: {}]
  %s3 = inlined_call_operand.hbm [shape: f32[128,128], index: 3, kind: input, shape index: {}]
  %s4 = inlined_call_operand.hbm [shape: f32[128,128], index: 4, kind: input, shape index: {}]
  %s5 = inlined_call_operand.vmem [shape: f32[8,128], index: 5, kind: input, shape index: {}]
  %s6 = inlined_call_operand.hbm [shape: f32[16,128], index: 6, kind: output, shape index: {}]
  %s7 = sld [smem:[#allocation0]]
  $region54: #{tpu_custom_call.1} parent=0
    _
  %s9 = ssub.s32 1, %s7
  %s10 = scalar_select 0, %s9, %s7
  $region1: #{tpu_custom_call.1} parent=0
    #allocation2 [shape = 'u8[8192]{0}', space=vmem, size = 0x2000, scoped, tag = 'input window, operand 0, single buffered']
    #allocation3 [shape = 's32[1]{0}', space=sflag, size = 0x4, scoped, tag = 'scoped memory for tpu_custom_call.1']
    #allocation4 [shape = 's32[1]{0}', space=sflag, size = 0x4, scoped, tag = 'scoped memory for tpu_custom_call.1']
    #allocation5 [shape = 'u8[65536]{0}', space=vmem, size = 0x10000, scoped, tag = 'input window, operand 1, single buffered']
    #allocation6 [shape = 's32[1]{0}', space=sflag, size = 0x4, scoped, tag = 'scoped memory for tpu_custom_call.1']
    #allocation7 [shape = 'u8[65536]{0}', space=vmem, size = 0x10000, scoped, tag = 'input window, operand 2, single buffered']
    #allocation8 [shape = 'u8[65536]{0}', space=vmem, size = 0x10000, scoped, tag = 'input window, operand 3, single buffered']
    #allocation9 [shape = 's32[1]{0}', space=sflag, size = 0x4, scoped, tag = 'scoped memory for tpu_custom_call.1']
    #allocation10 [shape = 'u8[65536]{0}', space=vmem, size = 0x10000, scoped, tag = 'input window, operand 4, single buffered']
    #allocation11 [shape = 'u8[8192]{0}', space=vmem, size = 0x2000, scoped, tag = 'output window, operand 0, single buffered']
    %11 = vsyncpa [#allocation3], 0
    %12 = vsyncpa [#allocation6], 0
    %13 = vsyncpa [#allocation9], 0
    %14 = vsyncpa [#allocation4], 0
    // Predicated region
    $region2: #{tpu_custom_call.1} parent=1 // pred_check
      _
    $region3: #{tpu_custom_call.1} parent=1 // pred_check_branch
      %16 = sbr.rel (0) target = $region5
    $region4: #{tpu_custom_call.1} parent=1 // pred_region
      %s18 = ssub.s32 256, 256
      %19 = vsyncadd [#allocation3], %s18
      %s20 = sshll.u32 [#allocation2], 4
      %s21 = int_to_ptr.vmem [resolvable:$true] %s20
      %26 = dma.hbm_to_vmem [thread:$0]  %s0, 256, %s21, [#allocation3], 128, 128, 8
    $region5: #{tpu_custom_call.1} parent=1 // pred_fallthru
      _
    // Predicated region
    $region6: #{tpu_custom_call.1} parent=1 // pred_check
      _
    $region7: #{tpu_custom_call.1} parent=1 // pred_check_branch
      %28 = sbr.rel (0) target = $region9
    $region8: #{tpu_custom_call.1} parent=1 // pred_region
      %s30 = ssub.s32 2048, 2048
      %31 = vsyncadd [#allocation6], %s30
      %s32 = sshll.u32 [#allocation5], 4
      %s33 = int_to_ptr.vmem [resolvable:$true] %s32
      %38 = dma.hbm_to_vmem [thread:$0]  %s1, 2048, %s33, [#allocation6], 128, 128, 8
    $region9: #{tpu_custom_call.1} parent=1 // pred_fallthru
      _
    // Predicated region
    $region10: #{tpu_custom_call.1} parent=1 // pred_check
      _
    $region11: #{tpu_custom_call.1} parent=1 // pred_check_branch
      %40 = sbr.rel (0) target = $region13
    $region12: #{tpu_custom_call.1} parent=1 // pred_region
      %s42 = ssub.s32 2048, 2048
      %43 = vsyncadd [#allocation6], %s42
      %s44 = sshll.u32 [#allocation7], 4
      %s45 = int_to_ptr.vmem [resolvable:$true] %s44
      %50 = dma.hbm_to_vmem [thread:$0]  %s2, 2048, %s45, [#allocation6], 128, 128, 8
    $region13: #{tpu_custom_call.1} parent=1 // pred_fallthru
      _
    // Predicated region
    $region14: #{tpu_custom_call.1} parent=1 // pred_check
      _
    $region15: #{tpu_custom_call.1} parent=1 // pred_check_branch
      %52 = sbr.rel (0) target = $region17
    $region16: #{tpu_custom_call.1} parent=1 // pred_region
      %s54 = ssub.s32 2048, 2048
      %55 = vsyncadd [#allocation9], %s54
      %s56 = sshll.u32 [#allocation8], 4
      %s57 = int_to_ptr.vmem [resolvable:$true] %s56
      %62 = dma.hbm_to_vmem [thread:$0]  %s3, 2048, %s57, [#allocation9], 128, 128, 8
    $region17: #{tpu_custom_call.1} parent=1 // pred_fallthru
      _
    // Predicated region
    $region18: #{tpu_custom_call.1} parent=1 // pred_check
      _
    $region19: #{tpu_custom_call.1} parent=1 // pred_check_branch
      %64 = sbr.rel (0) target = $region21
    $region20: #{tpu_custom_call.1} parent=1 // pred_region
      %s66 = ssub.s32 2048, 2048
      %67 = vsyncadd [#allocation9], %s66
      %s68 = sshll.u32 [#allocation10], 4
      %s69 = int_to_ptr.vmem [resolvable:$true] %s68
      %74 = dma.hbm_to_vmem [thread:$0]  %s4, 2048, %s69, [#allocation9], 128, 128, 8
    $region21: #{tpu_custom_call.1} parent=1 // pred_fallthru
      _
    // Predicated region
    $region22: #{tpu_custom_call.1} parent=1 // pred_check
      _
    $region23: #{tpu_custom_call.1} parent=1 // pred_check_branch
      %76 = sbr.rel (0) target = $region25
    $region24: #{tpu_custom_call.1} parent=1 // pred_region
      _
    $region25: #{tpu_custom_call.1} parent=1 // pred_fallthru
      _
    // Predicated region
    $region26: #{tpu_custom_call.1} parent=1 // pred_check
      _
    $region27: #{tpu_custom_call.1} parent=1 // pred_check_branch
      %78 = sbr.rel (0) target = $region29
    $region28: #{tpu_custom_call.1} parent=1 // pred_region
      %79 = dma.done [#allocation3], 256
    $region29: #{tpu_custom_call.1} parent=1 // pred_fallthru
      _
    // Predicated region
    $region30: #{tpu_custom_call.1} parent=1 // pred_check
      _
    $region31: #{tpu_custom_call.1} parent=1 // pred_check_branch
      %81 = sbr.rel (0) target = $region33
    $region32: #{tpu_custom_call.1} parent=1 // pred_region
      %82 = dma.done [#allocation6], 2048
    $region33: #{tpu_custom_call.1} parent=1 // pred_fallthru
      _
    // Predicated region
    $region34: #{tpu_custom_call.1} parent=1 // pred_check
      _
    $region35: #{tpu_custom_call.1} parent=1 // pred_check_branch
      %84 = sbr.rel (0) target = $region37
    $region36: #{tpu_custom_call.1} parent=1 // pred_region
      %85 = dma.done [#allocation6], 2048
    $region37: #{tpu_custom_call.1} parent=1 // pred_fallthru
      _
    // Predicated region
    $region38: #{tpu_custom_call.1} parent=1 // pred_check
      _
    $region39: #{tpu_custom_call.1} parent=1 // pred_check_branch
      %87 = sbr.rel (0) target = $region41
    $region40: #{tpu_custom_call.1} parent=1 // pred_region
      %88 = dma.done [#allocation9], 2048
    $region41: #{tpu_custom_call.1} parent=1 // pred_fallthru
      _
    // Predicated region
    $region42: #{tpu_custom_call.1} parent=1 // pred_check
      _
    $region43: #{tpu_custom_call.1} parent=1 // pred_check_branch
      %90 = sbr.rel (0) target = $region45
    $region44: #{tpu_custom_call.1} parent=1 // pred_region
      %91 = dma.done [#allocation9], 2048
    $region45: #{tpu_custom_call.1} parent=1 // pred_fallthru
      _
    %v92 = vld [vmem:[%s5] sm:$0xff]
    %v93 = vld [vmem:[#allocation2] sm:$0xff]
    %v94 = vld [vmem:[#allocation2 + $0x8] sm:$0xff]
    %v95 = vld [vmem:[#allocation5] sm:$0xff]
    %v96 = vld [vmem:[#allocation5 + $0x8] sm:$0xff]
    %v97 = vld [vmem:[#allocation5 + $0x10] sm:$0xff]
    %v98 = vld [vmem:[#allocation5 + $0x18] sm:$0xff]
    %v99 = vld [vmem:[#allocation5 + $0x20] sm:$0xff]
    %v100 = vld [vmem:[#allocation5 + $0x28] sm:$0xff]
    %v101 = vld [vmem:[#allocation5 + $0x30] sm:$0xff]
    %v102 = vld [vmem:[#allocation5 + $0x38] sm:$0xff]
    %v103 = vld [vmem:[#allocation5 + $0x40] sm:$0xff]
    %v104 = vld [vmem:[#allocation5 + $0x48] sm:$0xff]
    %v105 = vld [vmem:[#allocation5 + $0x50] sm:$0xff]
    %v106 = vld [vmem:[#allocation5 + $0x58] sm:$0xff]
    %v107 = vld [vmem:[#allocation5 + $0x60] sm:$0xff]
    %v108 = vld [vmem:[#allocation5 + $0x68] sm:$0xff]
    %v109 = vld [vmem:[#allocation5 + $0x70] sm:$0xff]
    %v110 = vld [vmem:[#allocation5 + $0x78] sm:$0xff]
    %v111 = vlaneseq
    %v112 = vshrl.u32 %v111, 7
    %v113 = vsub.s32 0, %v112
    %v114 = vrot.slane %v92, %v113
    %115 = vmatprep.subr.mxu0 0.0
    %116 = vmatpush1.msra.mxu0 %v110
    %117 = vmatprep.subr.mxu0 0.0
    %118 = vmatpush1.msra.mxu0 %v109
    %119 = vmatprep.subr.mxu0 0.0
    %120 = vmatpush1.msra.mxu0 %v108
    %121 = vmatprep.subr.mxu0 0.0
    %122 = vmatpush1.msra.mxu0 %v107
    %123 = vmatprep.subr.mxu0 0.0
    %124 = vmatpush1.msra.mxu0 %v106
    %125 = vmatprep.subr.mxu0 0.0
    %126 = vmatpush1.msra.mxu0 %v105
    %127 = vmatprep.subr.mxu0 0.0
    %128 = vmatpush1.msra.mxu0 %v104
    %129 = vmatprep.subr.mxu0 0.0
    %130 = vmatpush1.msra.mxu0 %v103
    %131 = vmatprep.subr.mxu0 0.0
    %132 = vmatpush1.msra.mxu0 %v102
    %133 = vmatprep.subr.mxu0 0.0
    %134 = vmatpush1.msra.mxu0 %v101
    %135 = vmatprep.subr.mxu0 0.0
    %136 = vmatpush1.msra.mxu0 %v100
    %137 = vmatprep.subr.mxu0 0.0
    %138 = vmatpush1.msra.mxu0 %v99
    %139 = vmatprep.subr.mxu0 0.0
    %140 = vmatpush1.msra.mxu0 %v98
    %141 = vmatprep.subr.mxu0 0.0
    %142 = vmatpush1.msra.mxu0 %v97
    %143 = vmatprep.subr.mxu0 0.0
    %144 = vmatpush1.msra.mxu0 %v96
    %145 = vmatprep.subr.mxu0 0.0
    %146 = vmatpush1.msra.mxu0 %v95
    %147 = vmatprep.subr.mxu0 0.0
    %148 = vmatpush2.msra.mxu0 0.0
    %149 = vmatprep.subr.mxu0 0.0
    %150 = vmatpush2.msra.mxu0 0.0
    %151 = vmatprep.subr.mxu0 0.0
    %152 = vmatpush2.msra.mxu0 0.0
    %153 = vmatprep.subr.mxu0 0.0
    %154 = vmatpush2.msra.mxu0 0.0
    %155 = vmatprep.subr.mxu0 0.0
    %156 = vmatpush2.msra.mxu0 0.0
    %157 = vmatprep.subr.mxu0 0.0
    %158 = vmatpush2.msra.mxu0 0.0
    %159 = vmatprep.subr.mxu0 0.0
    %160 = vmatpush2.msra.mxu0 0.0
    %161 = vmatprep.subr.mxu0 0.0
    %162 = vmatpush2.msra.mxu0 0.0
    %163 = vmatprep.subr.mxu0 0.0
    %164 = vmatpush2.msra.mxu0 0.0
    %165 = vmatprep.subr.mxu0 0.0
    %166 = vmatpush2.msra.mxu0 0.0
    %167 = vmatprep.subr.mxu0 0.0
    %168 = vmatpush2.msra.mxu0 0.0
    %169 = vmatprep.subr.mxu0 0.0
    %170 = vmatpush2.msra.mxu0 0.0
    %171 = vmatprep.subr.mxu0 0.0
    %172 = vmatpush2.msra.mxu0 0.0
    %173 = vmatprep.subr.mxu0 0.0
    %174 = vmatpush2.msra.mxu0 0.0
    %175 = vmatprep.subr.mxu0 0.0
    %176 = vmatpush2.msra.mxu0 0.0
    %177 = vmatprep.subr.mxu0 0.0
    %178 = vmatpush2.msra.mxu0 0.0
    %179 = vmatprep.mubr.f32.mxu0 0.0
    %180 = vmatmul.mubr.f32.gmra.mxu0 %v93
    %v181 = vpop.f32.mrf.mxu0
    %v182 = vadd.f32 %v114, %v181
    %v183 = vpop.f32.mrf.mxu0
    %184 = vmatprep.mubr.f32.mxu0 0.0
    %185 = vmatmul.mubr.f32.gmra.mxu0 %v94
    %v186 = vpop.f32.mrf.mxu0
    %v187 = vadd.f32 %v114, %v186
    %v188 = vpop.f32.mrf.mxu0
    %189 = vdwg.mxu0
    %v190 = vmul.f32 %v182, 0.2
    %v191 = vmul.f32 %v187, 0.2
    %v192 = vmax.f32 %v182, %v190
    %v193 = vmax.f32 %v187, %v191
    %v194 = vld [vmem:[#allocation7] sm:$0xff]
    %v195 = vld [vmem:[#allocation7 + $0x8] sm:$0xff]
    %v196 = vld [vmem:[#allocation7 + $0x10] sm:$0xff]
    %v197 = vld [vmem:[#allocation7 + $0x18] sm:$0xff]
    %v198 = vld [vmem:[#allocation7 + $0x20] sm:$0xff]
    %v199 = vld [vmem:[#allocation7 + $0x28] sm:$0xff]
    %v200 = vld [vmem:[#allocation7 + $0x30] sm:$0xff]
    %v201 = vld [vmem:[#allocation7 + $0x38] sm:$0xff]
    %v202 = vld [vmem:[#allocation7 + $0x40] sm:$0xff]
    %v203 = vld [vmem:[#allocation7 + $0x48] sm:$0xff]
    %v204 = vld [vmem:[#allocation7 + $0x50] sm:$0xff]
    %v205 = vld [vmem:[#allocation7 + $0x58] sm:$0xff]
    %v206 = vld [vmem:[#allocation7 + $0x60] sm:$0xff]
    %v207 = vld [vmem:[#allocation7 + $0x68] sm:$0xff]
    %v208 = vld [vmem:[#allocation7 + $0x70] sm:$0xff]
    %v209 = vld [vmem:[#allocation7 + $0x78] sm:$0xff]
    %v210 = vlaneseq
    %v211 = vshrl.u32 %v210, 7
    %v212 = vsub.s32 1, %v211
    %v213 = vrot.slane %v92, %v212
    %214 = vmatprep.subr.mxu0 0.0
    %215 = vmatpush1.msra.mxu0 %v209
    %216 = vmatprep.subr.mxu0 0.0
    %217 = vmatpush1.msra.mxu0 %v208
    %218 = vmatprep.subr.mxu0 0.0
    %219 = vmatpush1.msra.mxu0 %v207
    %220 = vmatprep.subr.mxu0 0.0
    %221 = vmatpush1.msra.mxu0 %v206
    %222 = vmatprep.subr.mxu0 0.0
    %223 = vmatpush1.msra.mxu0 %v205
    %224 = vmatprep.subr.mxu0 0.0
    %225 = vmatpush1.msra.mxu0 %v204
    %226 = vmatprep.subr.mxu0 0.0
    %227 = vmatpush1.msra.mxu0 %v203
    %228 = vmatprep.subr.mxu0 0.0
    %229 = vmatpush1.msra.mxu0 %v202
    %230 = vmatprep.subr.mxu0 0.0
    %231 = vmatpush1.msra.mxu0 %v201
    %232 = vmatprep.subr.mxu0 0.0
    %233 = vmatpush1.msra.mxu0 %v200
    %234 = vmatprep.subr.mxu0 0.0
    %235 = vmatpush1.msra.mxu0 %v199
    %236 = vmatprep.subr.mxu0 0.0
    %237 = vmatpush1.msra.mxu0 %v198
    %238 = vmatprep.subr.mxu0 0.0
    %239 = vmatpush1.msra.mxu0 %v197
    %240 = vmatprep.subr.mxu0 0.0
    %241 = vmatpush1.msra.mxu0 %v196
    %242 = vmatprep.subr.mxu0 0.0
    %243 = vmatpush1.msra.mxu0 %v195
    %244 = vmatprep.subr.mxu0 0.0
    %245 = vmatpush1.msra.mxu0 %v194
    %246 = vmatprep.subr.mxu0 0.0
    %247 = vmatpush2.msra.mxu0 0.0
    %248 = vmatprep.subr.mxu0 0.0
    %249 = vmatpush2.msra.mxu0 0.0
    %250 = vmatprep.subr.mxu0 0.0
    %251 = vmatpush2.msra.mxu0 0.0
    %252 = vmatprep.subr.mxu0 0.0
    %253 = vmatpush2.msra.mxu0 0.0
    %254 = vmatprep.subr.mxu0 0.0
    %255 = vmatpush2.msra.mxu0 0.0
    %256 = vmatprep.subr.mxu0 0.0
    %257 = vmatpush2.msra.mxu0 0.0
    %258 = vmatprep.subr.mxu0 0.0
    %259 = vmatpush2.msra.mxu0 0.0
    %260 = vmatprep.subr.mxu0 0.0
    %261 = vmatpush2.msra.mxu0 0.0
    %262 = vmatprep.subr.mxu0 0.0
    %263 = vmatpush2.msra.mxu0 0.0
    %264 = vmatprep.subr.mxu0 0.0
    %265 = vmatpush2.msra.mxu0 0.0
    %266 = vmatprep.subr.mxu0 0.0
    %267 = vmatpush2.msra.mxu0 0.0
    %268 = vmatprep.subr.mxu0 0.0
    %269 = vmatpush2.msra.mxu0 0.0
    %270 = vmatprep.subr.mxu0 0.0
    %271 = vmatpush2.msra.mxu0 0.0
    %272 = vmatprep.subr.mxu0 0.0
    %273 = vmatpush2.msra.mxu0 0.0
    %274 = vmatprep.subr.mxu0 0.0
    %275 = vmatpush2.msra.mxu0 0.0
    %276 = vmatprep.subr.mxu0 0.0
    %277 = vmatpush2.msra.mxu0 0.0
    %278 = vmatprep.mubr.f32.mxu0 0.0
    %279 = vmatmul.mubr.f32.gmra.mxu0 %v192
    %v280 = vpop.f32.mrf.mxu0
    %v281 = vadd.f32 %v213, %v280
    %v282 = vpop.f32.mrf.mxu0
    %283 = vmatprep.mubr.f32.mxu0 0.0
    %284 = vmatmul.mubr.f32.gmra.mxu0 %v193
    %v285 = vpop.f32.mrf.mxu0
    %v286 = vadd.f32 %v213, %v285
    %v287 = vpop.f32.mrf.mxu0
    %288 = vdwg.mxu0
    %v289 = vtanh.pop %v281
    %v290 = vtanh.pop %v286
    %v291 = vld [vmem:[#allocation8] sm:$0xff]
    %v292 = vld [vmem:[#allocation8 + $0x8] sm:$0xff]
    %v293 = vld [vmem:[#allocation8 + $0x10] sm:$0xff]
    %v294 = vld [vmem:[#allocation8 + $0x18] sm:$0xff]
    %v295 = vld [vmem:[#allocation8 + $0x20] sm:$0xff]
    %v296 = vld [vmem:[#allocation8 + $0x28] sm:$0xff]
    %v297 = vld [vmem:[#allocation8 + $0x30] sm:$0xff]
    %v298 = vld [vmem:[#allocation8 + $0x38] sm:$0xff]
    %v299 = vld [vmem:[#allocation8 + $0x40] sm:$0xff]
    %v300 = vld [vmem:[#allocation8 + $0x48] sm:$0xff]
    %v301 = vld [vmem:[#allocation8 + $0x50] sm:$0xff]
    %v302 = vld [vmem:[#allocation8 + $0x58] sm:$0xff]
    %v303 = vld [vmem:[#allocation8 + $0x60] sm:$0xff]
    %v304 = vld [vmem:[#allocation8 + $0x68] sm:$0xff]
    %v305 = vld [vmem:[#allocation8 + $0x70] sm:$0xff]
    %v306 = vld [vmem:[#allocation8 + $0x78] sm:$0xff]
    %v307 = vlaneseq
    %v308 = vshrl.u32 %v307, 7
    %v309 = vsub.s32 2, %v308
    %v310 = vrot.slane %v92, %v309
    %311 = vmatprep.subr.mxu0 0.0
    %312 = vmatpush1.msra.mxu0 %v306
    %313 = vmatprep.subr.mxu0 0.0
    %314 = vmatpush1.msra.mxu0 %v305
    %315 = vmatprep.subr.mxu0 0.0
    %316 = vmatpush1.msra.mxu0 %v304
    %317 = vmatprep.subr.mxu0 0.0
    %318 = vmatpush1.msra.mxu0 %v303
    %319 = vmatprep.subr.mxu0 0.0
    %320 = vmatpush1.msra.mxu0 %v302
    %321 = vmatprep.subr.mxu0 0.0
    %322 = vmatpush1.msra.mxu0 %v301
    %323 = vmatprep.subr.mxu0 0.0
    %324 = vmatpush1.msra.mxu0 %v300
    %325 = vmatprep.subr.mxu0 0.0
    %326 = vmatpush1.msra.mxu0 %v299
    %327 = vmatprep.subr.mxu0 0.0
    %328 = vmatpush1.msra.mxu0 %v298
    %329 = vmatprep.subr.mxu0 0.0
    %330 = vmatpush1.msra.mxu0 %v297
    %331 = vmatprep.subr.mxu0 0.0
    %332 = vmatpush1.msra.mxu0 %v296
    %333 = vmatprep.subr.mxu0 0.0
    %334 = vmatpush1.msra.mxu0 %v295
    %335 = vmatprep.subr.mxu0 0.0
    %336 = vmatpush1.msra.mxu0 %v294
    %337 = vmatprep.subr.mxu0 0.0
    %338 = vmatpush1.msra.mxu0 %v293
    %339 = vmatprep.subr.mxu0 0.0
    %340 = vmatpush1.msra.mxu0 %v292
    %341 = vmatprep.subr.mxu0 0.0
    %342 = vmatpush1.msra.mxu0 %v291
    %343 = vmatprep.subr.mxu0 0.0
    %344 = vmatpush2.msra.mxu0 0.0
    %345 = vmatprep.subr.mxu0 0.0
    %346 = vmatpush2.msra.mxu0 0.0
    %347 = vmatprep.subr.mxu0 0.0
    %348 = vmatpush2.msra.mxu0 0.0
    %349 = vmatprep.subr.mxu0 0.0
    %350 = vmatpush2.msra.mxu0 0.0
    %351 = vmatprep.subr.mxu0 0.0
    %352 = vmatpush2.msra.mxu0 0.0
    %353 = vmatprep.subr.mxu0 0.0
    %354 = vmatpush2.msra.mxu0 0.0
    %355 = vmatprep.subr.mxu0 0.0
    %356 = vmatpush2.msra.mxu0 0.0
    %357 = vmatprep.subr.mxu0 0.0
    %358 = vmatpush2.msra.mxu0 0.0
    %359 = vmatprep.subr.mxu0 0.0
    %360 = vmatpush2.msra.mxu0 0.0
    %361 = vmatprep.subr.mxu0 0.0
    %362 = vmatpush2.msra.mxu0 0.0
    %363 = vmatprep.subr.mxu0 0.0
    %364 = vmatpush2.msra.mxu0 0.0
    %365 = vmatprep.subr.mxu0 0.0
    %366 = vmatpush2.msra.mxu0 0.0
    %367 = vmatprep.subr.mxu0 0.0
    %368 = vmatpush2.msra.mxu0 0.0
    %369 = vmatprep.subr.mxu0 0.0
    %370 = vmatpush2.msra.mxu0 0.0
    %371 = vmatprep.subr.mxu0 0.0
    %372 = vmatpush2.msra.mxu0 0.0
    %373 = vmatprep.subr.mxu0 0.0
    %374 = vmatpush2.msra.mxu0 0.0
    %375 = vmatprep.mubr.f32.mxu0 0.0
    %376 = vmatmul.mubr.f32.gmra.mxu0 %v289
    %v377 = vpop.f32.mrf.mxu0
    %v378 = vadd.f32 %v310, %v377
    %v379 = vpop.f32.mrf.mxu0
    %380 = vmatprep.mubr.f32.mxu0 0.0
    %381 = vmatmul.mubr.f32.gmra.mxu0 %v290
    %v382 = vpop.f32.mrf.mxu0
    %v383 = vadd.f32 %v310, %v382
    %v384 = vpop.f32.mrf.mxu0
    %385 = vdwg.mxu0
    %v386 = vtanh.pop %v378
    %v387 = vtanh.pop %v383
    %v388 = vld [vmem:[#allocation10] sm:$0xff]
    %v389 = vld [vmem:[#allocation10 + $0x8] sm:$0xff]
    %v390 = vld [vmem:[#allocation10 + $0x10] sm:$0xff]
    %v391 = vld [vmem:[#allocation10 + $0x18] sm:$0xff]
    %v392 = vld [vmem:[#allocation10 + $0x20] sm:$0xff]
    %v393 = vld [vmem:[#allocation10 + $0x28] sm:$0xff]
    %v394 = vld [vmem:[#allocation10 + $0x30] sm:$0xff]
    %v395 = vld [vmem:[#allocation10 + $0x38] sm:$0xff]
    %v396 = vld [vmem:[#allocation10 + $0x40] sm:$0xff]
    %v397 = vld [vmem:[#allocation10 + $0x48] sm:$0xff]
    %v398 = vld [vmem:[#allocation10 + $0x50] sm:$0xff]
    %v399 = vld [vmem:[#allocation10 + $0x58] sm:$0xff]
    %v400 = vld [vmem:[#allocation10 + $0x60] sm:$0xff]
    %v401 = vld [vmem:[#allocation10 + $0x68] sm:$0xff]
    %v402 = vld [vmem:[#allocation10 + $0x70] sm:$0xff]
    %v403 = vld [vmem:[#allocation10 + $0x78] sm:$0xff]
    %v404 = vlaneseq
    %v405 = vshrl.u32 %v404, 7
    %v406 = vsub.s32 3, %v405
    %v407 = vrot.slane %v92, %v406
    %408 = vmatprep.subr.mxu0 0.0
    %409 = vmatpush1.msra.mxu0 %v403
    %410 = vmatprep.subr.mxu0 0.0
    %411 = vmatpush1.msra.mxu0 %v402
    %412 = vmatprep.subr.mxu0 0.0
    %413 = vmatpush1.msra.mxu0 %v401
    %414 = vmatprep.subr.mxu0 0.0
    %415 = vmatpush1.msra.mxu0 %v400
    %416 = vmatprep.subr.mxu0 0.0
    %417 = vmatpush1.msra.mxu0 %v399
    %418 = vmatprep.subr.mxu0 0.0
    %419 = vmatpush1.msra.mxu0 %v398
    %420 = vmatprep.subr.mxu0 0.0
    %421 = vmatpush1.msra.mxu0 %v397
    %422 = vmatprep.subr.mxu0 0.0
    %423 = vmatpush1.msra.mxu0 %v396
    %424 = vmatprep.subr.mxu0 0.0
    %425 = vmatpush1.msra.mxu0 %v395
    %426 = vmatprep.subr.mxu0 0.0
    %427 = vmatpush1.msra.mxu0 %v394
    %428 = vmatprep.subr.mxu0 0.0
    %429 = vmatpush1.msra.mxu0 %v393
    %430 = vmatprep.subr.mxu0 0.0
    %431 = vmatpush1.msra.mxu0 %v392
    %432 = vmatprep.subr.mxu0 0.0
    %433 = vmatpush1.msra.mxu0 %v391
    %434 = vmatprep.subr.mxu0 0.0
    %435 = vmatpush1.msra.mxu0 %v390
    %436 = vmatprep.subr.mxu0 0.0
    %437 = vmatpush1.msra.mxu0 %v389
    %438 = vmatprep.subr.mxu0 0.0
    %439 = vmatpush1.msra.mxu0 %v388
    %440 = vmatprep.subr.mxu0 0.0
    %441 = vmatpush2.msra.mxu0 0.0
    %442 = vmatprep.subr.mxu0 0.0
    %443 = vmatpush2.msra.mxu0 0.0
    %444 = vmatprep.subr.mxu0 0.0
    %445 = vmatpush2.msra.mxu0 0.0
    %446 = vmatprep.subr.mxu0 0.0
    %447 = vmatpush2.msra.mxu0 0.0
    %448 = vmatprep.subr.mxu0 0.0
    %449 = vmatpush2.msra.mxu0 0.0
    %450 = vmatprep.subr.mxu0 0.0
    %451 = vmatpush2.msra.mxu0 0.0
    %452 = vmatprep.subr.mxu0 0.0
    %453 = vmatpush2.msra.mxu0 0.0
    %454 = vmatprep.subr.mxu0 0.0
    %455 = vmatpush2.msra.mxu0 0.0
    %456 = vmatprep.subr.mxu0 0.0
    %457 = vmatpush2.msra.mxu0 0.0
    %458 = vmatprep.subr.mxu0 0.0
    %459 = vmatpush2.msra.mxu0 0.0
    %460 = vmatprep.subr.mxu0 0.0
    %461 = vmatpush2.msra.mxu0 0.0
    %462 = vmatprep.subr.mxu0 0.0
    %463 = vmatpush2.msra.mxu0 0.0
    %464 = vmatprep.subr.mxu0 0.0
    %465 = vmatpush2.msra.mxu0 0.0
    %466 = vmatprep.subr.mxu0 0.0
    %467 = vmatpush2.msra.mxu0 0.0
    %468 = vmatprep.subr.mxu0 0.0
    %469 = vmatpush2.msra.mxu0 0.0
    %470 = vmatprep.subr.mxu0 0.0
    %471 = vmatpush2.msra.mxu0 0.0
    %472 = vmatprep.mubr.f32.mxu0 0.0
    %473 = vmatmul.mubr.f32.gmra.mxu0 %v386
    %v474 = vpop.f32.mrf.mxu0
    %v475 = vadd.f32 %v407, %v474
    %v476 = vpop.f32.mrf.mxu0
    %477 = vmatprep.mubr.f32.mxu0 0.0
    %478 = vmatmul.mubr.f32.gmra.mxu0 %v387
    %v479 = vpop.f32.mrf.mxu0
    %v480 = vadd.f32 %v407, %v479
    %v481 = vpop.f32.mrf.mxu0
    %482 = vdwg.mxu0
    %v483 = vmul.f32 %v475, 0.5
    %v484 = vmul.f32 %v480, 0.5
    %v485 = vtanh.pop %v483
    %v486 = vtanh.pop %v484
    %v487 = vadd.f32 %v485, 1.0
    %v488 = vadd.f32 %v486, 1.0
    %v489 = vmul.f32 %v487, 0.5
    %v490 = vmul.f32 %v488, 0.5
    %491 = vst [vmem:[#allocation11] sm:$0xff] %v489
    %492 = vst [vmem:[#allocation11 + $0x8] sm:$0xff] %v490
    // Predicated region
    $region46: #{tpu_custom_call.1} parent=1 // pred_check
      _
    $region47: #{tpu_custom_call.1} parent=1 // pred_check_branch
      %494 = sbr.rel (0) target = $region49
    $region48: #{tpu_custom_call.1} parent=1 // pred_region
      %s496 = ssub.s32 256, 256
      %497 = vsyncadd [#allocation4], %s496
      %s498 = sshll.u32 [#allocation11], 4
      %s499 = int_to_ptr.vmem [resolvable:$true] %s498
      %504 = dma.vmem_to_hbm [thread:$0]  %s499, 256, %s6, [#allocation4], 128, 128, 8
    $region49: #{tpu_custom_call.1} parent=1 // pred_fallthru
      _
    // Predicated region
    $region50: #{tpu_custom_call.1} parent=1 // pred_check
      _
    $region51: #{tpu_custom_call.1} parent=1 // pred_check_branch
      %506 = sbr.rel (0) target = $region53
    $region52: #{tpu_custom_call.1} parent=1 // pred_region
      %507 = dma.done [#allocation4], 256
    $region53: #{tpu_custom_call.1} parent=1 // pred_fallthru
      _
    %508 = vsyncpa [#allocation3], 1
    %509 = vsyncpa [#allocation6], 1
    %510 = vsyncpa [#allocation9], 1
    %511 = vsyncpa [#allocation4], 1

</llo_original>
